<compile_context>
chip_gen: v7x
topology: tpu7x:2x2x1
jax: 0.10.0
libtpu: 0.0.40
codegen_flags: <defaults>
</compile_context>

<pallas_src>
import functools

import numpy as np
import jax
import jax.numpy as jnp
from jax import lax
from jax.experimental import pallas as pl
from jax.experimental.pallas import tpu as pltpu


def _round_up(x, m):
    return ((x + m - 1) // m) * m


def _vmem_budget():
    """Per-generation (per-input block bytes, scoped VMEM limit bytes)."""
    cap = 64 * 1024 * 1024                      # conservative fallback (v7x per-TC)
    try:
        cap = int(pltpu.get_tpu_info().vmem_capacity_bytes)
    except Exception:
        pass
    # ~3/4 of physical VMEM as the scoped limit: 96 MiB on v5e/v6e, 48 MiB on v7x.
    vmem_limit = min((cap * 3) // 4, 100 * 1024 * 1024)
    # 2 inputs x 2 pipeline buffers + <=1 block-equivalent f32 accumulator + slack.
    max_block = max(1 << 20, min(vmem_limit // 6, 16 * 1024 * 1024))
    return max_block, vmem_limit


def _make_mae_kernel(B, S, TB, TS):
    need_b_mask = (B % TB) != 0
    need_s_mask = (S % TS) != 0

    def kernel(kept_c_ref, p_ref, t_ref, o_ref, acc_ref):
        del kept_c_ref                      # only consumed by the index_maps
        bi = pl.program_id(1)
        si = pl.program_id(2)

        @pl.when(si == 0)
        def _init():
            acc_ref[...] = jnp.zeros_like(acc_ref)

        # (TB, 1, TS, LANE) -> (TB, TS, LANE); upcast to f32 in-kernel (inputs
        # may be bf16) so accumulation numerics match the PyTorch reference.
        p = jnp.squeeze(p_ref[...], axis=1).astype(jnp.float32)
        t = jnp.squeeze(t_ref[...], axis=1).astype(jnp.float32)
        d = jnp.abs(p - t)

        if need_b_mask or need_s_mask:
            # Masking only runs on edge blocks; interior blocks take the plain
            # path (keeps the VALU slot from becoming the limiter).
            conds = []
            if need_b_mask:
                conds.append(bi == pl.num_programs(1) - 1)
            if need_s_mask:
                conds.append(si == pl.num_programs(2) - 1)
            edge = functools.reduce(jnp.logical_or, conds)

            @pl.when(edge)
            def _acc_masked():
                # OOB region of a remainder tile holds unspecified VMEM data
                # (possibly NaN bit patterns) -> `where`, not a multiply.
                valid = jnp.ones(d.shape, dtype=jnp.bool_)
                if need_b_mask:
                    b_idx = lax.broadcasted_iota(jnp.int32, d.shape, 0) + bi * TB
                    valid = jnp.logical_and(valid, b_idx < B)
                if need_s_mask:
                    s_idx = lax.broadcasted_iota(jnp.int32, d.shape, 1) + si * TS
                    valid = jnp.logical_and(valid, s_idx < S)
                acc_ref[...] += jnp.sum(jnp.where(valid, d, 0.0), axis=0)

            @pl.when(jnp.logical_not(edge))
            def _acc_plain():
                acc_ref[...] += jnp.sum(d, axis=0)
        else:
            acc_ref[...] += jnp.sum(d, axis=0)

        # Cross-lane reduce + store once per (channel, batch_block).
        @pl.when(si == pl.num_programs(2) - 1)
        def _finalize():
            o_ref[...] = jnp.reshape(jnp.sum(acc_ref[...]), (1, 1, 1))

    return kernel


def mae_pallas(pred, true, exclude_mask, *, max_block_bytes=None):
    """MAE over kept channels.

    pred, true: (B, C, H, W) arrays (f32 or bf16).
    exclude_mask: STATIC host bool array over C (must not be a traced value).
    """
    B, C, H, W = pred.shape
    keep = ~np.asarray(exclude_mask, dtype=bool)
    kept_channels = np.nonzero(keep)[0].astype(np.int32)
    n_sel = int(kept_channels.shape[0])
    if n_sel == 0 or B * H * W == 0:
        return jnp.float32(jnp.nan)          # torch mean over empty selection is NaN

    count = B * n_sel * H * W

    derived_block, vmem_limit = _vmem_budget()
    if max_block_bytes is None:
        max_block_bytes = derived_block

    # ---- lane-dense layout: free reshape of contiguous NCHW when possible ----
    hw = H * W
    if hw % 128 == 0:
        LANE, S = 128, hw // 128
        pred_v = jnp.reshape(pred, (B, C, S, LANE))
        true_v = jnp.reshape(true, (B, C, S, LANE))
    else:
        LANE, S = W, H
        pred_v, true_v = pred, true

    # ---- tile sizing: biggest (TB, 1, TS, LANE) block within the budget ----
    itemsize = jnp.dtype(pred.dtype).itemsize
    lane_padded = _round_up(LANE, 128)                 # lane padding
    sub = max(8, 32 // itemsize)                       # sublane pack: 8 f32 / 16 bf16
    # Cap TS so the f32 (TS, LANE) accumulator also fits in one block budget.
    max_ts = max(sub,
                 (max_block_bytes // (lane_padded * max(itemsize, 4))) // sub * sub)
    TS = S if S <= max_ts else max_ts                  # full dim or multiple of sub
    plane_bytes = _round_up(TS, sub) * lane_padded * itemsize
    TB = min(B, max(1, max_block_bytes // plane_bytes))
    nB = (B + TB - 1) // TB
    nS = (S + TS - 1) // TS

    def data_index_map(ci, bi, si, kc):
        return (bi, kc[ci], si, 0)                     # only kept channels are DMA'd

    data_spec = pl.BlockSpec((TB, 1, TS, LANE), data_index_map)
    # Per-(channel, batch_block) partials -> both leading grid axes are parallel.
    out_spec = pl.BlockSpec((1, 1, 1), lambda ci, bi, si, kc: (ci * nB + bi, 0, 0))

    partials = pl.pallas_call(
        _make_mae_kernel(B, S, TB, TS),
        out_shape=jax.ShapeDtypeStruct((n_sel * nB, 1, 1), jnp.float32),
        grid_spec=pltpu.PrefetchScalarGridSpec(
            num_scalar_prefetch=1,
            grid=(n_sel, nB, nS),
            in_specs=[data_spec, data_spec],
            out_specs=out_spec,
            scratch_shapes=[pltpu.VMEM((TS, LANE), jnp.float32)],
        ),
        compiler_params=pltpu.CompilerParams(
            dimension_semantics=("parallel", "parallel", "arbitrary"),
            vmem_limit_bytes=vmem_limit,
        ),
    )(jnp.asarray(kept_channels), pred_v, true_v)

    inv_count = 1.0 / float(count)                     # exact host-double reciprocal
    return jnp.sum(partials) * jnp.float32(inv_count)


if __name__ == "__main__":
    key = jax.random.PRNGKey(0)
    k1, k2, k3, k4, k5, k6 = jax.random.split(key, 6)

    # --- test 1: canonical small shape, lane-dense reshape path (H*W=256) ---
    B, C, H, W = 2, 4, 16, 16
    pred = jax.random.normal(k1, (B, C, H, W), dtype=jnp.float32)
    true = jax.random.normal(k2, (B, C, H, W), dtype=jnp.float32)
    exclude_mask = np.array([False, True, False, False])     # keep {0, 2, 3}
    result = mae_pallas(pred, true, exclude_mask)
    jax.block_until_ready(result)
    keep = ~exclude_mask
    ref = jnp.mean(jnp.abs(pred[:, keep] - true[:, keep]))
    assert jnp.allclose(result, ref, rtol=1e-5, atol=1e-6), (result, ref)

    # --- test 2: non-128 fallback layout + row-remainder masking (TS=8, S=12) ---
    B2, C2, H2, W2 = 3, 5, 12, 16
    pred2 = jax.random.normal(k3, (B2, C2, H2, W2), dtype=jnp.float32)
    true2 = jax.random.normal(k4, (B2, C2, H2, W2), dtype=jnp.float32)
    exclude2 = np.array([False, True, False, True, False])   # keep {0, 2, 4}
    keep2 = ~exclude2
    ref2 = jnp.mean(jnp.abs(pred2[:, keep2] - true2[:, keep2]))
    r2 = mae_pallas(pred2, true2, exclude2, max_block_bytes=2048)
    jax.block_until_ready(r2)
    assert jnp.allclose(r2, ref2, rtol=1e-5, atol=1e-6), (r2, ref2)

    # --- test 3: batch-remainder masking (TB=2 with B=3) ---
    r3 = mae_pallas(pred2, true2, exclude2, max_block_bytes=16384)
    jax.block_until_ready(r3)
    assert jnp.allclose(r3, ref2, rtol=1e-5, atol=1e-6), (r3, ref2)

    # --- test 4: lane-dense reshape path WITH row-remainder masking ---
    B4, C4, H4, W4 = 2, 3, 96, 16                            # H*W=1536 -> S=12, LANE=128
    pred4 = jax.random.normal(k5, (B4, C4, H4, W4), dtype=jnp.float32)
    true4 = jax.random.normal(k6, (B4, C4, H4, W4), dtype=jnp.float32)
    exclude4 = np.array([True, False, False])                # keep {1, 2}
    keep4 = ~exclude4
    ref4 = jnp.mean(jnp.abs(pred4[:, keep4] - true4[:, keep4]))
    r4 = mae_pallas(pred4, true4, exclude4, max_block_bytes=2048)
    jax.block_until_ready(r4)
    assert jnp.allclose(r4, ref4, rtol=1e-5, atol=1e-6), (r4, ref4)

    # --- test 5: bf16 inputs (16-row sublane packing), per-generation budget ---
    pred5 = pred.astype(jnp.bfloat16)
    true5 = true.astype(jnp.bfloat16)
    ref5 = jnp.mean(jnp.abs(pred5[:, keep].astype(jnp.float32)
                            - true5[:, keep].astype(jnp.float32)))
    r5 = mae_pallas(pred5, true5, exclude_mask)
    jax.block_until_ready(r5)
    assert jnp.allclose(r5, ref5, rtol=1e-4, atol=1e-5), (r5, ref5)

    print("KERNEL_OK")
</pallas_src>

<mosaic_0001>
module attributes {stable_mosaic.version = 11 : i64} {
  func.func @kernel(%arg0: i32, %arg1: i32, %arg2: i32, %arg3: memref<3xi32, #tpu.memory_space<smem>>, %arg4: memref<2x1x2x128xf32, #tpu.memory_space<vmem>>, %arg5: memref<2x1x2x128xf32, #tpu.memory_space<vmem>>, %arg6: memref<1x1x1xf32, #tpu.memory_space<vmem>>, %arg7: memref<2x128xf32, #tpu.memory_space<vmem>>) attributes {dimension_semantics = [#tpu.dimension_semantics<parallel>, #tpu.dimension_semantics<parallel>, #tpu.dimension_semantics<arbitrary>], iteration_bounds = array<i64: 3, 1, 1>, scalar_prefetch = 1 : i64, scratch_operands = 1 : i64, tpu.core_type = #tpu.core_type<tc>, window_params = [{transform_indices = @transform_0, window_bounds = array<i64: 2, 1, 2, 128>}, {transform_indices = @transform_1, window_bounds = array<i64: 2, 1, 2, 128>}, {transform_indices = @transform_2, window_bounds = array<i64: 1, 1, 1>}]} {
    %c0_i32 = arith.constant 0 : i32
    %0 = arith.cmpi eq, %arg2, %c0_i32 : i32
    %1 = arith.extui %0 : i1 to i32
    %c0_i32_0 = arith.constant 0 : i32
    %2 = arith.cmpi ne, %1, %c0_i32_0 : i32
    scf.if %2 {
      %cst_14 = arith.constant 0.000000e+00 : f32
      %16 = vector.broadcast %cst_14 : f32 to vector<2x128xf32>
      %c0_15 = arith.constant 0 : index
      %c0_16 = arith.constant 0 : index
      %17 = vector.load %arg7[%c0_15, %c0_16] : memref<2x128xf32, #tpu.memory_space<vmem>>, vector<2x128xf32>
      tpu.vector_store %arg7[%c0_15, %c0_16], %16 {strides = array<i32>} : memref<2x128xf32, #tpu.memory_space<vmem>>, vector<2x128xf32>,
    } else {
    }
    %c0 = arith.constant 0 : index
    %c0_1 = arith.constant 0 : index
    %c0_2 = arith.constant 0 : index
    %c0_3 = arith.constant 0 : index
    %3 = vector.load %arg4[%c0, %c0_1, %c0_2, %c0_3] : memref<2x1x2x128xf32, #tpu.memory_space<vmem>>, vector<2x1x2x128xf32>
    %4 = vector.shape_cast %3 : vector<2x1x2x128xf32> to vector<2x2x128xf32>
    %c0_4 = arith.constant 0 : index
    %c0_5 = arith.constant 0 : index
    %c0_6 = arith.constant 0 : index
    %c0_7 = arith.constant 0 : index
    %5 = vector.load %arg5[%c0_4, %c0_5, %c0_6, %c0_7] : memref<2x1x2x128xf32, #tpu.memory_space<vmem>>, vector<2x1x2x128xf32>
    %6 = vector.shape_cast %5 : vector<2x1x2x128xf32> to vector<2x2x128xf32>
    %7 = arith.subf %4, %6 : vector<2x2x128xf32>
    %8 = math.absf %7 : vector<2x2x128xf32>
    %c0_8 = arith.constant 0 : index
    %c0_9 = arith.constant 0 : index
    %9 = vector.load %arg7[%c0_8, %c0_9] : memref<2x128xf32, #tpu.memory_space<vmem>>, vector<2x128xf32>
    %cst = arith.constant dense<0.000000e+00> : vector<2x128xf32>
    %10 = vector.multi_reduction <add>, %8, %cst [0] : vector<2x2x128xf32> to vector<2x128xf32>
    %11 = arith.addf %9, %10 : vector<2x128xf32>
    %c0_10 = arith.constant 0 : index
    %c0_11 = arith.constant 0 : index
    %12 = vector.load %arg7[%c0_10, %c0_11] : memref<2x128xf32, #tpu.memory_space<vmem>>, vector<2x128xf32>
    tpu.vector_store %arg7[%c0_10, %c0_11], %11 {strides = array<i32>} : memref<2x128xf32, #tpu.memory_space<vmem>>, vector<2x128xf32>,
    %c0_i32_12 = arith.constant 0 : i32
    %13 = arith.cmpi eq, %arg2, %c0_i32_12 : i32
    %14 = arith.extui %13 : i1 to i32
    %c0_i32_13 = arith.constant 0 : i32
    %15 = arith.cmpi ne, %14, %c0_i32_13 : i32
    scf.if %15 {
      %c0_14 = arith.constant 0 : index
      %c0_15 = arith.constant 0 : index
      %16 = vector.load %arg7[%c0_14, %c0_15] : memref<2x128xf32, #tpu.memory_space<vmem>>, vector<2x128xf32>
      %17 = vector.shape_cast %16 : vector<2x128xf32> to vector<1x2x128xf32>
      %cst_16 = arith.constant dense<0.000000e+00> : vector<1xf32>
      %18 = vector.multi_reduction <add>, %17, %cst_16 [1, 2] : vector<1x2x128xf32> to vector<1xf32>
      %19 = vector.shape_cast %18 : vector<1xf32> to vector<1x1x1xf32>
      %20 = vector.extract %19[0, 0, 0] : f32 from vector<1x1x1xf32>
      %21 = vector.broadcast %20 : f32 to vector<1x1x1xf32>
      %c0_17 = arith.constant 0 : index
      %c0_18 = arith.constant 0 : index
      %c0_19 = arith.constant 0 : index
      %22 = vector.load %arg6[%c0_17, %c0_18, %c0_19] : memref<1x1x1xf32, #tpu.memory_space<vmem>>, vector<1x1x1xf32>
      tpu.vector_store %arg6[%c0_17, %c0_18, %c0_19], %21 {strides = array<i32>} : memref<1x1x1xf32, #tpu.memory_space<vmem>>, vector<1x1x1xf32>,
    } else {
    }
    return
  }
  func.func @transform_0(%arg0: i32, %arg1: i32, %arg2: i32, %arg3: memref<3xi32, #tpu.memory_space<smem>>) -> (i32, i32, i32, i32) {
    %0 = arith.index_cast %arg0 : i32 to index
    %1 = memref.load %arg3[%0] : memref<3xi32, #tpu.memory_space<smem>>
    %c0_i32 = arith.constant 0 : i32
    %c0_i32_0 = arith.constant 0 : i32
    return %arg1, %1, %arg2, %c0_i32 : i32, i32, i32, i32
  }
  func.func @transform_1(%arg0: i32, %arg1: i32, %arg2: i32, %arg3: memref<3xi32, #tpu.memory_space<smem>>) -> (i32, i32, i32, i32) {
    %0 = arith.index_cast %arg0 : i32 to index
    %1 = memref.load %arg3[%0] : memref<3xi32, #tpu.memory_space<smem>>
    %c0_i32 = arith.constant 0 : i32
    %c0_i32_0 = arith.constant 0 : i32
    return %arg1, %1, %arg2, %c0_i32 : i32, i32, i32, i32
  }
  func.func @transform_2(%arg0: i32, %arg1: i32, %arg2: i32, %arg3: memref<3xi32, #tpu.memory_space<smem>>) -> (i32, i32, i32) {
    %c1_i32 = arith.constant 1 : i32
    %0 = arith.muli %arg0, %c1_i32 : i32
    %1 = arith.addi %0, %arg1 : i32
    %c0_i32 = arith.constant 0 : i32
    %c0_i32_0 = arith.constant 0 : i32
    %c0_i32_1 = arith.constant 0 : i32
    return %1, %c0_i32, %c0_i32_0 : i32, i32, i32
  }
}

</mosaic_0001>

<llo_original>
// kernel: tpu_custom_call.1
$region0: #{tpu_custom_call.1}
  #allocation0 [shape = 'u32[]', space=smem, size = 0x4, offset = 0x4, fixed_abs, tag = 'smem constant byte address 0x4 - core index']
  #allocation1 [shape = 'u32[144,128]{1,0:T(1,128)}', space=vmem, size = 0x12000, scoped, tag = 'internal scratch']
  #allocation2 [shape = 'f32[2,128]{1,0:T(2,128)}', space=vmem, size = 0x400, scoped, tag = 'scratch operand']
  #allocation3 [shape = 's32[1]{0}', space=sflag, size = 0x4, scoped, tag = 'scoped memory for tpu_custom_call.1']
  #allocation4 [shape = 'u8[512]{0}', space=smem, size = 0x200, scoped, tag = 'prefetched SMEM operand 0']
  %s0 = inlined_call_operand.hbm [shape: s32[3], index: 0, kind: input, shape index: {}]
  %s1 = inlined_call_operand.hbm [shape: f32[2,4,2,128], index: 1, kind: input, shape index: {}]
  %s2 = inlined_call_operand.hbm [shape: f32[2,4,2,128], index: 2, kind: input, shape index: {}]
  %s3 = inlined_call_operand.vmem [shape: f32[3,1,1], index: 3, kind: output, shape index: {}]
  %s4 = sld [smem:[#allocation0]]
  $region57: #{tpu_custom_call.1} parent=0
    _
  %s6 = ssub.s32 1, %s4
  %s7 = scalar_select 0, %s6, %s4
  %9 = dma.hbm_to_smem %s0, 16, [#allocation4], [#allocation3]
  %10 = dma.done [#allocation3], 16
  %11 = sfence
  $region1: #{tpu_custom_call.1} parent=0
    #allocation5 [shape = 'u8[4096]{0}', space=vmem, size = 0x1000, scoped, tag = 'input window, operand 1']
    #allocation6 [shape = 's32[2]{0}', space=sflag, size = 0x8, scoped, tag = 'scoped memory for tpu_custom_call.1']
    #allocation7 [shape = 'u8[4096]{0}', space=vmem, size = 0x1000, scoped, tag = 'input window, operand 2']
    #allocation8 [shape = 's32[2]{0}', space=sflag, size = 0x8, scoped, tag = 'scoped memory for tpu_custom_call.1']
    %12 = vsyncpa [#allocation6], 0
    %s13 = scalar_lea.sflag [#allocation6], 1
    %14 = vsyncpa %s13, 0
    %15 = vsyncpa [#allocation8], 0
    %s16 = scalar_lea.sflag [#allocation8], 1
    %17 = vsyncpa %s16, 0
    loop: start=0, step=1, limit=5
    $region2: #{tpu_custom_call.1} parent=1 // loop_pre_header
      _
    $region3: #{tpu_custom_call.1} parent=1 // loop_header
      %s19 = sphi 0, %s23
      %p20 = scmp.ge.s32.totalorder %s19, 5
      %s26 = sphi 0, %s45
      %s27 = sphi 0, %s41
      %s28 = sphi 0, %s37
      %s29 = sphi 0, %s26
      %s30 = sphi 0, %s27
      %s31 = sphi 0, %s28
      %s32 = sphi 0, %s29
      %s33 = sphi 0, %s30
      %s34 = sphi 0, %s31
      %s54 = sphi 0, %s56
      %s57 = sphi 0, %s54
      %s58 = sphi 0, %s57
      %s74 = sphi 0, %s58
      %s86 = sphi 0, %s88
      %s89 = sphi 0, %s86
      %s90 = sphi 0, %s89
      %s106 = sphi 0, %s90
      %s114 = sphi 0, %s116
      %s117 = sphi 0, %s114
      %s118 = sphi 0, %s117
      %s134 = sphi 0, %s118
    $region4: #{tpu_custom_call.1} parent=1 // loop_header_branch
      %22 = sbr.rel (%p20) target = $region8
    $region5: #{tpu_custom_call.1} parent=1 // loop_body
      %s24 = ssub.s32 %s19, 1
      %s25 = ssub.s32 %s19, 2
      %s35 = sadd.s32 1, %s28
      %p36 = scmp.ge.s32.totalorder %s35, 1
      %s37 = scalar_select %p36, 0, %s35
      %s38 = sadd.s32 1, %s27
      %s39 = scalar_select %p36, %s38, %s27
      %p40 = scmp.ge.s32.totalorder %s39, 1
      %s41 = scalar_select %p40, 0, %s39
      %s42 = sadd.s32 1, %s26
      %s43 = scalar_select %p40, %s42, %s26
      %p44 = scmp.ge.s32.totalorder %s43, 3
      %s45 = scalar_select %p44, 0, %s43
      %s46 = sld [smem:[#allocation4 + %s26]]
      %s47 = sld [smem:[#allocation4 + %s45]]
      %s48 = ssub.s32 %s27, %s41
      %s49 = ssub.s32 %s46, %s47
      %s50 = sor.u32 %s48, %s49
      %s51 = ssub.s32 %s28, %s37
      %s52 = sor.u32 %s50, %s51
      %p53 = scmp.eq.s32.totalorder %s52, 0
      %s55 = sadd.s32 %s54, 1
      %s56 = scalar_select %p53, %s54, %s55
      %p59 = pneg %p53
      %p60 = scmp.eq.s32.totalorder %s19, 2
      %p61 = por %p59, %p60
      %p62 = scmp.ne.s32.totalorder %s54, %s57
      %p63 = scmp.eq.s32.totalorder %s19, 0
      %p64 = por %p62, %p63
      %p65 = scmp.ne.s32.totalorder %s54, %s57
      %p66 = scmp.eq.s32.totalorder %s24, 2
      %p67 = por %p65, %p66
      %p68 = scmp.ne.s32.totalorder %s57, %s58
      %p69 = scmp.eq.s32.totalorder %s24, 0
      %p70 = por %p68, %p69
      %p71 = scmp.ne.s32.totalorder %s57, %s58
      %p72 = scmp.eq.s32.totalorder %s25, 2
      %p73 = por %p71, %p72
      %p75 = scmp.ne.s32.totalorder %s58, %s74
      %p76 = scmp.eq.s32.totalorder %s25, 0
      %p77 = por %p75, %p76
      %s78 = sld [smem:[#allocation4 + %s26]]
      %s79 = sld [smem:[#allocation4 + %s45]]
      %s80 = ssub.s32 %s27, %s41
      %s81 = ssub.s32 %s78, %s79
      %s82 = sor.u32 %s80, %s81
      %s83 = ssub.s32 %s28, %s37
      %s84 = sor.u32 %s82, %s83
      %p85 = scmp.eq.s32.totalorder %s84, 0
      %s87 = sadd.s32 %s86, 1
      %s88 = scalar_select %p85, %s86, %s87
      %p91 = pneg %p85
      %p92 = scmp.eq.s32.totalorder %s19, 2
      %p93 = por %p91, %p92
      %p94 = scmp.ne.s32.totalorder %s86, %s89
      %p95 = scmp.eq.s32.totalorder %s19, 0
      %p96 = por %p94, %p95
      %p97 = scmp.ne.s32.totalorder %s86, %s89
      %p98 = scmp.eq.s32.totalorder %s24, 2
      %p99 = por %p97, %p98
      %p100 = scmp.ne.s32.totalorder %s89, %s90
      %p101 = scmp.eq.s32.totalorder %s24, 0
      %p102 = por %p100, %p101
      %p103 = scmp.ne.s32.totalorder %s89, %s90
      %p104 = scmp.eq.s32.totalorder %s25, 2
      %p105 = por %p103, %p104
      %p107 = scmp.ne.s32.totalorder %s90, %s106
      %p108 = scmp.eq.s32.totalorder %s25, 0
      %p109 = por %p107, %p108
      %s110 = sadd.s32 %s26, %s27
      %s111 = sadd.s32 %s45, %s41
      %s112 = ssub.s32 %s110, %s111
      %p113 = scmp.eq.s32.totalorder %s112, 0
      %s115 = sadd.s32 %s114, 1
      %s116 = scalar_select %p113, %s114, %s115
      %p119 = pneg %p113
      %p120 = scmp.eq.s32.totalorder %s19, 2
      %p121 = por %p119, %p120
      %p122 = scmp.ne.s32.totalorder %s114, %s117
      %p123 = scmp.eq.s32.totalorder %s19, 0
      %p124 = por %p122, %p123
      %p125 = scmp.ne.s32.totalorder %s114, %s117
      %p126 = scmp.eq.s32.totalorder %s24, 2
      %p127 = por %p125, %p126
      %p128 = scmp.ne.s32.totalorder %s117, %s118
      %p129 = scmp.eq.s32.totalorder %s24, 0
      %p130 = por %p128, %p129
      %p131 = scmp.ne.s32.totalorder %s117, %s118
      %p132 = scmp.eq.s32.totalorder %s25, 2
      %p133 = por %p131, %p132
      %p135 = scmp.ne.s32.totalorder %s118, %s134
      %p136 = scmp.eq.s32.totalorder %s25, 0
      %p137 = por %p135, %p136
      %p138 = scmp.le.s32.totalorder 1, %s19
      %p139 = scmp.lt.s32.totalorder %s19, 4
      %p140 = pnand %p138, %p139
      %p141 = pneg %p140
      // Predicated region
      $region9: #{tpu_custom_call.1} parent=5 // pred_check
        _
      $region10: #{tpu_custom_call.1} parent=5 // pred_check_branch
        %143 = sbr.rel (%p140) target = $region12
      $region11: #{tpu_custom_call.1} parent=5 // pred_region
        %s144 = ssub.s32 %s19, 1
      $region12: #{tpu_custom_call.1} parent=5 // pred_fallthru
        _
      %p145 = scmp.lt.s32.totalorder %s19, 3
      // Predicated region
      $region13: #{tpu_custom_call.1} parent=5 // pred_check
        %p146 = pneg %p145
      $region14: #{tpu_custom_call.1} parent=5 // pred_check_branch
        %148 = sbr.rel (%p146) target = $region16
      $region15: #{tpu_custom_call.1} parent=5 // pred_region
        // Predicated region
        $region17: #{tpu_custom_call.1} parent=15 // pred_check
          %p149 = pneg %p64
        $region18: #{tpu_custom_call.1} parent=15 // pred_check_branch
          %151 = sbr.rel (%p149) target = $region20
        $region19: #{tpu_custom_call.1} parent=15 // pred_region
          %s152 = sand.u32 %s54, 1
          %s153 = scalar_lea.sflag [#allocation6], %s152
          %s154 = sand.u32 %s54, 1
          %s155 = smul.addr %s154, 4
          %s156 = scalar_lea.vmem [#allocation5], %s155
          %s157 = sld [smem:[#allocation4 + %s26]]
          %s158 = smul.u32 2, %s27
          %s160 = ssub.s32 64, 64
          %161 = vsyncadd %s153, %s160
          %s162 = sadd.s32 %s28, %s157
          %s163 = smul.addr %s158, 4
          %s164 = sadd.s32 %s162, %s163
          %s165 = smul.addr %s164, 32
          %s166 = scalar_lea.hbm %s1, %s165
          %s167 = sshll.u32 %s156, 4
          %s168 = int_to_ptr.vmem [resolvable:$true] %s167
          %173 = dma.hbm_to_vmem [thread:$0]  %s166, 64, %s168, %s153, 128, 32, 2
        $region20: #{tpu_custom_call.1} parent=15 // pred_fallthru
          _
        // Predicated region
        $region21: #{tpu_custom_call.1} parent=15 // pred_check
          %p174 = pneg %p96
        $region22: #{tpu_custom_call.1} parent=15 // pred_check_branch
          %176 = sbr.rel (%p174) target = $region24
        $region23: #{tpu_custom_call.1} parent=15 // pred_region
          %s177 = sand.u32 %s86, 1
          %s178 = scalar_lea.sflag [#allocation8], %s177
          %s179 = sand.u32 %s86, 1
          %s180 = smul.addr %s179, 4
          %s181 = scalar_lea.vmem [#allocation7], %s180
          %s182 = sld [smem:[#allocation4 + %s26]]
          %s183 = smul.u32 2, %s27
          %s185 = ssub.s32 64, 64
          %186 = vsyncadd %s178, %s185
          %s187 = sadd.s32 %s28, %s182
          %s188 = smul.addr %s183, 4
          %s189 = sadd.s32 %s187, %s188
          %s190 = smul.addr %s189, 32
          %s191 = scalar_lea.hbm %s2, %s190
          %s192 = sshll.u32 %s181, 4
          %s193 = int_to_ptr.vmem [resolvable:$true] %s192
          %198 = dma.hbm_to_vmem [thread:$0]  %s191, 64, %s193, %s178, 128, 32, 2
        $region24: #{tpu_custom_call.1} parent=15 // pred_fallthru
          _
      $region16: #{tpu_custom_call.1} parent=5 // pred_fallthru
        _
      %p199 = scmp.le.s32.totalorder 1, %s19
      %p200 = scmp.lt.s32.totalorder %s19, 4
      %p201 = pnand %p199, %p200
      %p202 = pneg %p201
      // Predicated region
      $region25: #{tpu_custom_call.1} parent=5 // pred_check
        _
      $region26: #{tpu_custom_call.1} parent=5 // pred_check_branch
        %204 = sbr.rel (%p201) target = $region28
      $region27: #{tpu_custom_call.1} parent=5 // pred_region
        %s205 = ssub.s32 %s19, 1
        %s206 = sand.u32 %s57, 1
        %s207 = scalar_lea.sflag [#allocation6], %s206
        %s208 = sand.u32 %s57, 1
        %s209 = smul.addr %s208, 4
        %s210 = scalar_lea.vmem [#allocation5], %s209
        // Predicated region
        $region29: #{tpu_custom_call.1} parent=27 // pred_check
          %p211 = pneg %p70
        $region30: #{tpu_custom_call.1} parent=27 // pred_check_branch
          %213 = sbr.rel (%p211) target = $region32
        $region31: #{tpu_custom_call.1} parent=27 // pred_region
          %214 = dma.done %s207, 64
        $region32: #{tpu_custom_call.1} parent=27 // pred_fallthru
          _
        %s215 = sand.u32 %s89, 1
        %s216 = scalar_lea.sflag [#allocation8], %s215
        %s217 = sand.u32 %s89, 1
        %s218 = smul.addr %s217, 4
        %s219 = scalar_lea.vmem [#allocation7], %s218
        // Predicated region
        $region33: #{tpu_custom_call.1} parent=27 // pred_check
          %p220 = pneg %p102
        $region34: #{tpu_custom_call.1} parent=27 // pred_check_branch
          %222 = sbr.rel (%p220) target = $region36
        $region35: #{tpu_custom_call.1} parent=27 // pred_region
          %223 = dma.done %s216, 64
        $region36: #{tpu_custom_call.1} parent=27 // pred_fallthru
          _
        %s224 = sand.u32 %s57, 1
        %s225 = scalar_lea.sflag [#allocation6], %s224
        %s226 = sand.u32 %s57, 1
        %s227 = smul.addr %s226, 4
        %s228 = scalar_lea.vmem [#allocation5], %s227
        %p229 = pneg %p70
        %p230 = pneg %p67
        %s231 = sand.u32 %s89, 1
        %s232 = scalar_lea.sflag [#allocation8], %s231
        %s233 = sand.u32 %s89, 1
        %s234 = smul.addr %s233, 4
        %s235 = scalar_lea.vmem [#allocation7], %s234
        %p236 = pneg %p102
        %p237 = pneg %p99
        %p238 = pneg %p130
        %p239 = pneg %p127
        %s240 = sadd.s32 %s29, %s30
        %p241 = scmp.lt.s32.totalorder %s240, 2
        %s242 = scalar_select %p241, %s240, 2
        %s243 = scalar_lea.vmem %s3, %s242
        %s244 = sld [smem:[#allocation4 + %s29]]
        %s245 = smul.u32 2, %s30
        %s246 = sld [smem:[#allocation4 + %s29]]
        %s247 = smul.u32 2, %s30
        %s248 = sadd.s32 %s29, %s30
        %p249 = scmp.lt.s32.totalorder %s248, 2
        %s250 = scalar_select %p249, %s248, 2
        %s251 = scalar_lea.vmem %s3, %s250
        %s252 = sadd.s32 %s29, %s30
        %p253 = scmp.eq.s32.totalorder %s31, 0
        // Predicated region
        $region37: #{tpu_custom_call.1} parent=27 // pred_check
          %p254 = pneg %p253
        $region38: #{tpu_custom_call.1} parent=27 // pred_check_branch
          %256 = sbr.rel (%p254) target = $region40
        $region39: #{tpu_custom_call.1} parent=27 // pred_region
          %257 = vst [vmem:[#allocation2] sm:$0x3] 0.0
        $region40: #{tpu_custom_call.1} parent=27 // pred_fallthru
          _
        %v258 = vld [vmem:[%s210] sm:$0x3]
        %v259 = vld [vmem:[%s210 + $0x2] sm:$0x3]
        %v260 = vld [vmem:[%s219] sm:$0x3]
        %v261 = vld [vmem:[%s219 + $0x2] sm:$0x3]
        %v262 = vsub.f32 %v258, %v260
        %v263 = vsub.f32 %v259, %v261
        %v264 = vand.u32 2147483647, %v262
        %v265 = vand.u32 2147483647, %v263
        %v266 = vld [vmem:[#allocation2] sm:$0x3]
        %vm267 = vcmask 1041408
        %v268 = vsel %vm267, %v264, 0.0
        %v269 = vsel %vm267, %v265, 0.0
        %v270 = vadd.f32 %v268, %v269
        %v271 = vadd.f32 %v266, %v270
        %272 = vst [vmem:[#allocation2] sm:$0x3] %v271
        // Predicated region
        $region41: #{tpu_custom_call.1} parent=27 // pred_check
          %p273 = pneg %p253
        $region42: #{tpu_custom_call.1} parent=27 // pred_check_branch
          %275 = sbr.rel (%p273) target = $region44
        $region43: #{tpu_custom_call.1} parent=27 // pred_region
          %v276 = vld [vmem:[#allocation2] sm:$0x3]
          %v277 = vsel %vm267, %v276, 0.0
          %278 = vadd.xlane.f32.xlu0 %v277
          %v279 = vpop.xlane.xlu0 %278
          %v280 = vrot.slane %v279, 4
          %v281 = vadd.f32 %v279, %v280
          %v282 = vrot.slane %v281, 2
          %v283 = vadd.f32 %v281, %v282
          %v284 = vrot.slane %v283, 1
          %v285 = vadd.f32 %v283, %v284
          %s286 = vtos %v285
          %v287 = vstv %s286
          %vm288 = vcmask 0
          %289 = vst.msk [vmem:[%s251] sm:$0x1] %vm288, %v287
        $region44: #{tpu_custom_call.1} parent=27 // pred_fallthru
          _
        %s290 = sadd.s32 %s29, %s30
        %p291 = scmp.lt.s32.totalorder %s290, 2
        %s292 = scalar_select %p291, %s290, 2
        %s293 = scalar_lea.vmem %s3, %s292
        // Predicated region
        $region45: #{tpu_custom_call.1} parent=27 // pred_check
          %p294 = pneg %p127
        $region46: #{tpu_custom_call.1} parent=27 // pred_check_branch
          %296 = sbr.rel (%p294) target = $region48
        $region47: #{tpu_custom_call.1} parent=27 // pred_region
          %s297 = sadd.s32 %s29, %s30
        $region48: #{tpu_custom_call.1} parent=27 // pred_fallthru
          _
      $region28: #{tpu_custom_call.1} parent=5 // pred_fallthru
        _
      %p298 = scmp.le.s32.totalorder 2, %s19
      // Predicated region
      $region49: #{tpu_custom_call.1} parent=5 // pred_check
        %p299 = pneg %p298
      $region50: #{tpu_custom_call.1} parent=5 // pred_check_branch
        %301 = sbr.rel (%p299) target = $region52
      $region51: #{tpu_custom_call.1} parent=5 // pred_region
        %s302 = ssub.s32 %s19, 2
        // Predicated region
        $region53: #{tpu_custom_call.1} parent=51 // pred_check
          %p303 = pneg %p133
        $region54: #{tpu_custom_call.1} parent=51 // pred_check_branch
          %305 = sbr.rel (%p303) target = $region56
        $region55: #{tpu_custom_call.1} parent=51 // pred_region
          %s306 = sadd.s32 %s32, %s33
          %p307 = scmp.lt.s32.totalorder %s306, 2
          %s308 = scalar_select %p307, %s306, 2
          %s309 = scalar_lea.vmem %s3, %s308
        $region56: #{tpu_custom_call.1} parent=51 // pred_fallthru
          _
      $region52: #{tpu_custom_call.1} parent=5 // pred_fallthru
        _
    $region6: #{tpu_custom_call.1} parent=1 // loop_footer
      %s23 = sadd.s32 1, %s19
    $region7: #{tpu_custom_call.1} parent=1 // loop_footer_branch
      %18 = sbr.rel target = $region3
    $region8: #{tpu_custom_call.1} parent=1 // loop_exit
      _
    %310 = vsyncpa [#allocation6], 1
    %s311 = scalar_lea.sflag [#allocation6], 1
    %312 = vsyncpa %s311, 1
    %313 = vsyncpa [#allocation8], 1
    %s314 = scalar_lea.sflag [#allocation8], 1
    %315 = vsyncpa %s314, 1

</llo_original>
